<compile_context>
chip_gen: v5e
topology: v5e:2x2
jax: 0.10.0
libtpu: 0.0.40
codegen_flags: <defaults>
</compile_context>

<pallas_src>
import math
from functools import partial

import jax
import jax.numpy as jnp
from jax.experimental import pallas as pl
from jax.experimental.pallas import tpu as pltpu


# ----------------------------- Pallas kernel -----------------------------

def _toeplitz_copy_kernel(ext_ref, out_ref, *, length, row_tile):
    """out_ref[r, j, :] = ext[(length-1) - (i0 + r) + j, :]  (pure copy).

    ext is the clip-extended sinusoid table, resident in VMEM.  For output row
    i = i0 + r the needed rows are the contiguous window starting at
    (length-1) - i, so each row is one dynamic-sublane-slice load + one static
    store.  No MXU, no one-hot, no integer div/mod — writeback-bound.
    """
    i0 = pl.program_id(0) * row_tile
    # Static Python unroll (row_tile is small & compile-time): the output
    # store index stays static; only the ext-window start is dynamic.
    for r in range(row_tile):
        start = (length - 1) - (i0 + r)
        out_ref[r] = ext_ref[pl.ds(start, length), :]


def _pick_row_tile(length: int, depth: int) -> int:
    """Rows per grid step: must divide L (equal blocks), keep the per-step
    output slab around the 0.5-2 MiB HBM-roofline sweet spot, keep >= 4 equal
    'parallel' steps (>= 2 for tiny L) for v7x megacore, and bound the static
    unroll length."""
    if length <= 1:
        return 1
    bytes_per_row = length * depth * 4
    cap = max(1, (2 * 1024 * 1024) // bytes_per_row)   # ~2 MiB output per step
    cap = min(cap, 32)                                  # bound static unroll
    if length >= 4:
        cap = min(cap, length // 4)                     # >= 4 parallel steps
    else:
        cap = min(cap, length // 2)                     # >= 2 parallel steps
    cap = max(cap, 1)
    best = 1
    for t in range(1, cap + 1):
        if length % t == 0:
            best = t
    return best


def nezha_positions_encoding_pallas(table: jax.Array, length: int,
                                    max_relative_position: int) -> jax.Array:
    """Compute the (length, length, depth) NeZHA positions_encoding buffer."""
    vocab, depth = table.shape

    # Clip-extended Toeplitz table: ext[k] = table[clip(k-(L-1), ±max_rel)+max_rel].
    # <= 2L-1 distinct rows; tiny O(L*depth) init-time prep in plain JAX —
    # the L^2 expansion (the heavy part) happens in the kernel.
    rows = 2 * length - 1
    rows_pad = ((rows + 7) // 8) * 8                    # sublane-aligned alloc
    k = jnp.arange(rows_pad)
    ids = jnp.clip(k - (length - 1), -max_relative_position,
                   max_relative_position) + max_relative_position
    ext = table[ids].astype(jnp.float32)                # (rows_pad, depth)

    row_tile = _pick_row_tile(length, depth)
    grid = (length // row_tile,)

    cost = pl.CostEstimate(
        flops=0,
        transcendentals=0,
        bytes_accessed=4 * (length * length * depth + rows_pad * depth),
    )

    return pl.pallas_call(
        partial(_toeplitz_copy_kernel, length=length, row_tile=row_tile),
        out_shape=jax.ShapeDtypeStruct((length, length, depth), jnp.float32),
        grid_spec=pltpu.PrefetchScalarGridSpec(
            num_scalar_prefetch=0,
            grid=grid,
            in_specs=[
                # Tiny table, fully resident (block dims == array dims).
                pl.BlockSpec((rows_pad, depth), lambda g: (0, 0)),
            ],
            # Last two block dims equal the full array dims -> legal for any
            # L / depth (no odd-L fallback problem); produced directly in the
            # PyTorch buffer layout, no post-kernel transpose.
            out_specs=pl.BlockSpec((row_tile, length, depth),
                                   lambda g: (g, 0, 0)),
        ),
        compiler_params=pltpu.CompilerParams(
            dimension_semantics=("parallel",),
        ),
        cost_estimate=cost,
    )(ext)


# --------------------------- Module equivalent ---------------------------

class NeZHARelativePositionsEncoding:
    """JAX/Pallas port of the PyTorch NeZHARelativePositionsEncoding."""

    def __init__(self, length: int, depth: int, max_relative_position: int = 127):
        vocab_size = max_relative_position * 2 + 1

        # Sinusoidal embeddings table (deterministic "parameter", plain JAX).
        position = jnp.arange(0, vocab_size, dtype=jnp.float32)[:, None]
        div_term = jnp.exp(
            jnp.arange(0, depth, 2).astype(jnp.float32) * (-math.log(10000.0) / depth)
        )
        table = jnp.zeros((vocab_size, depth), dtype=jnp.float32)
        table = table.at[:, 0::2].set(jnp.sin(position * div_term))
        table = table.at[:, 1::2].set(jnp.cos(position * div_term)[:, : depth // 2])

        # Hot precompute on TPU: L^2 expansion of the Toeplitz buffer done by
        # the Pallas kernel as a pure copy from the clip-extended table.
        self.positions_encoding = nezha_positions_encoding_pallas(
            table, length, max_relative_position
        )

    def __call__(self, length: int) -> jax.Array:
        # TODO(synk): forward() is a pure slice; kept in plain JAX (no kernel needed).
        return self.positions_encoding[:length, :length, :]


# -------------------------------- main -----------------------------------

if __name__ == "__main__":
    max_len = 16        # constructed length L
    depth = 32          # relative-attention head depth
    max_relative_position = 127
    query_len = 8       # forward(length)

    # Module has no learned parameters / tensor inputs (fully deterministic);
    # key created only to follow the required deterministic setup.
    _ = jax.random.PRNGKey(0)

    module = NeZHARelativePositionsEncoding(
        length=max_len, depth=depth, max_relative_position=max_relative_position
    )
    out = jax.block_until_ready(module(query_len))

    # Pure-JAX reference (no Pallas): gather semantics of the PyTorch module.
    vocab_size = 2 * max_relative_position + 1
    position = jnp.arange(0, vocab_size, dtype=jnp.float32)[:, None]
    div_term = jnp.exp(
        jnp.arange(0, depth, 2).astype(jnp.float32) * (-math.log(10000.0) / depth)
    )
    ref_table = jnp.zeros((vocab_size, depth), jnp.float32)
    ref_table = ref_table.at[:, 0::2].set(jnp.sin(position * div_term))
    ref_table = ref_table.at[:, 1::2].set(jnp.cos(position * div_term)[:, : depth // 2])
    rv = jnp.arange(max_len)
    ids = jnp.clip(
        rv[None, :] - rv[:, None], -max_relative_position, max_relative_position
    ) + max_relative_position
    ref = ref_table[ids][:query_len, :query_len, :]

    assert out.shape == (query_len, query_len, depth), out.shape
    assert out.dtype == jnp.float32
    assert jnp.allclose(out, ref, atol=1e-6), float(jnp.abs(out - ref).max())

    print("KERNEL_OK")
</pallas_src>

<mosaic_0001>
module attributes {stable_mosaic.version = 11 : i64} {
  func.func @_toeplitz_copy_kernel(%arg0: i32, %arg1: memref<32x32xf32, #tpu.memory_space<vmem>>, %arg2: memref<4x16x32xf32, #tpu.memory_space<vmem>>) attributes {dimension_semantics = [#tpu.dimension_semantics<parallel>], iteration_bounds = array<i64: 4>, scalar_prefetch = 0 : i64, scratch_operands = 0 : i64, tpu.core_type = #tpu.core_type<tc>, window_params = [{pipeline_mode = #tpu.pipeline_mode<synchronous>, transform_indices = @transform_0, window_bounds = array<i64: 32, 32>}, {transform_indices = @transform_1, window_bounds = array<i64: 4, 16, 32>}]} {
    %c4_i32 = arith.constant 4 : i32
    %0 = arith.muli %arg0, %c4_i32 : i32
    %c0_i32 = arith.constant 0 : i32
    %1 = arith.addi %0, %c0_i32 : i32
    %c15_i32 = arith.constant 15 : i32
    %2 = arith.subi %c15_i32, %1 : i32
    %3 = arith.index_cast %2 : i32 to index
    %c0 = arith.constant 0 : index
    %4 = vector.load %arg1[%3, %c0] : memref<32x32xf32, #tpu.memory_space<vmem>>, vector<16x32xf32>
    %c0_0 = arith.constant 0 : index
    %c0_1 = arith.constant 0 : index
    %c0_2 = arith.constant 0 : index
    %5 = vector.load %arg2[%c0_0, %c0_1, %c0_2] : memref<4x16x32xf32, #tpu.memory_space<vmem>>, vector<1x16x32xf32>
    %6 = vector.shape_cast %5 : vector<1x16x32xf32> to vector<16x32xf32>
    %7 = vector.shape_cast %4 : vector<16x32xf32> to vector<1x16x32xf32>
    tpu.vector_store %arg2[%c0_0, %c0_1, %c0_2], %7 {strides = array<i32>} : memref<4x16x32xf32, #tpu.memory_space<vmem>>, vector<1x16x32xf32>,
    %c1_i32 = arith.constant 1 : i32
    %8 = arith.addi %0, %c1_i32 : i32
    %c15_i32_3 = arith.constant 15 : i32
    %9 = arith.subi %c15_i32_3, %8 : i32
    %10 = arith.index_cast %9 : i32 to index
    %c0_4 = arith.constant 0 : index
    %11 = vector.load %arg1[%10, %c0_4] : memref<32x32xf32, #tpu.memory_space<vmem>>, vector<16x32xf32>
    %c1 = arith.constant 1 : index
    %c0_5 = arith.constant 0 : index
    %c0_6 = arith.constant 0 : index
    %12 = vector.load %arg2[%c1, %c0_5, %c0_6] : memref<4x16x32xf32, #tpu.memory_space<vmem>>, vector<1x16x32xf32>
    %13 = vector.shape_cast %12 : vector<1x16x32xf32> to vector<16x32xf32>
    %14 = vector.shape_cast %11 : vector<16x32xf32> to vector<1x16x32xf32>
    tpu.vector_store %arg2[%c1, %c0_5, %c0_6], %14 {strides = array<i32>} : memref<4x16x32xf32, #tpu.memory_space<vmem>>, vector<1x16x32xf32>,
    %c2_i32 = arith.constant 2 : i32
    %15 = arith.addi %0, %c2_i32 : i32
    %c15_i32_7 = arith.constant 15 : i32
    %16 = arith.subi %c15_i32_7, %15 : i32
    %17 = arith.index_cast %16 : i32 to index
    %c0_8 = arith.constant 0 : index
    %18 = vector.load %arg1[%17, %c0_8] : memref<32x32xf32, #tpu.memory_space<vmem>>, vector<16x32xf32>
    %c2 = arith.constant 2 : index
    %c0_9 = arith.constant 0 : index
    %c0_10 = arith.constant 0 : index
    %19 = vector.load %arg2[%c2, %c0_9, %c0_10] : memref<4x16x32xf32, #tpu.memory_space<vmem>>, vector<1x16x32xf32>
    %20 = vector.shape_cast %19 : vector<1x16x32xf32> to vector<16x32xf32>
    %21 = vector.shape_cast %18 : vector<16x32xf32> to vector<1x16x32xf32>
    tpu.vector_store %arg2[%c2, %c0_9, %c0_10], %21 {strides = array<i32>} : memref<4x16x32xf32, #tpu.memory_space<vmem>>, vector<1x16x32xf32>,
    %c3_i32 = arith.constant 3 : i32
    %22 = arith.addi %0, %c3_i32 : i32
    %c15_i32_11 = arith.constant 15 : i32
    %23 = arith.subi %c15_i32_11, %22 : i32
    %24 = arith.index_cast %23 : i32 to index
    %c0_12 = arith.constant 0 : index
    %25 = vector.load %arg1[%24, %c0_12] : memref<32x32xf32, #tpu.memory_space<vmem>>, vector<16x32xf32>
    %c3 = arith.constant 3 : index
    %c0_13 = arith.constant 0 : index
    %c0_14 = arith.constant 0 : index
    %26 = vector.load %arg2[%c3, %c0_13, %c0_14] : memref<4x16x32xf32, #tpu.memory_space<vmem>>, vector<1x16x32xf32>
    %27 = vector.shape_cast %26 : vector<1x16x32xf32> to vector<16x32xf32>
    %28 = vector.shape_cast %25 : vector<16x32xf32> to vector<1x16x32xf32>
    tpu.vector_store %arg2[%c3, %c0_13, %c0_14], %28 {strides = array<i32>} : memref<4x16x32xf32, #tpu.memory_space<vmem>>, vector<1x16x32xf32>,
    return
  }
  func.func @transform_0(%arg0: i32) -> (i32, i32) {
    %c0_i32 = arith.constant 0 : i32
    %c0_i32_0 = arith.constant 0 : i32
    %c0_i32_1 = arith.constant 0 : i32
    return %c0_i32, %c0_i32_0 : i32, i32
  }
  func.func @transform_1(%arg0: i32) -> (i32, i32, i32) {
    %c0_i32 = arith.constant 0 : i32
    %c0_i32_0 = arith.constant 0 : i32
    %c0_i32_1 = arith.constant 0 : i32
    return %arg0, %c0_i32, %c0_i32_0 : i32, i32, i32
  }
}

</mosaic_0001>

<llo_original>
// kernel: tpu_custom_call.1
$region0: #{tpu_custom_call.1}
  #allocation0 [shape = 'u32[]', space=smem, size = 0x4, offset = 0x4, fixed_abs, tag = 'smem constant byte address 0x4 - core index']
  #allocation1 [shape = 'u32[72,128]{1,0:T(1,128)}', space=vmem, size = 0x9000, scoped, tag = 'internal scratch']
  %s0 = inlined_call_operand.hbm [shape: f32[32,32], index: 0, kind: input, shape index: {}]
  %s1 = inlined_call_operand.hbm [shape: f32[16,16,32], index: 1, kind: output, shape index: {}]
  %s2 = sld [smem:[#allocation0]]
  $region41: #{tpu_custom_call.1} parent=0
    _
  %s4 = ssub.s32 1, %s2
  %s5 = scalar_select 0, %s4, %s2
  $region1: #{tpu_custom_call.1} parent=0
    #allocation2 [shape = 'u8[16384]{0}', space=vmem, size = 0x4000, scoped, tag = 'input window, operand 0, single buffered']
    #allocation3 [shape = 's32[2]{0}', space=sflag, size = 0x8, scoped, tag = 'scoped memory for tpu_custom_call.1']
    #allocation4 [shape = 's32[2]{0}', space=sflag, size = 0x8, scoped, tag = 'scoped memory for tpu_custom_call.1']
    #allocation5 [shape = 'u8[65536]{0}', space=vmem, size = 0x10000, scoped, tag = 'output window, operand 0']
    %6 = vsyncpa [#allocation3], 0
    %7 = vsyncpa [#allocation4], 0
    %s8 = scalar_lea.sflag [#allocation4], 1
    %9 = vsyncpa %s8, 0
    loop: start=0, step=1, limit=6
    $region2: #{tpu_custom_call.1} parent=1 // loop_pre_header
      _
    $region3: #{tpu_custom_call.1} parent=1 // loop_header
      %s11 = sphi 0, %s15
      %p12 = scmp.ge.s32.totalorder %s11, 6
      %s19 = sphi 0, %s19
      %s21 = sphi 0, %s19
      %s22 = sphi 0, %s21
      %s36 = sphi 0, %s22
      %s42 = sphi 0, %s44
      %s45 = sphi 0, %s42
      %s46 = sphi 0, %s45
      %s62 = sphi 0, %s46
    $region4: #{tpu_custom_call.1} parent=1 // loop_header_branch
      %14 = sbr.rel (%p12) target = $region8
    $region5: #{tpu_custom_call.1} parent=1 // loop_body
      %s16 = ssub.s32 %s11, 1
      %s17 = ssub.s32 %s11, 2
      %s18 = sadd.s32 %s11, 1
      %s20 = sadd.s32 %s19, 1
      %p23 = scmp.eq.s32.totalorder %s11, 3
      %p24 = scmp.ne.s32.totalorder %s19, %s21
      %p25 = scmp.eq.s32.totalorder %s11, 0
      %p26 = por %p24, %p25
      %p27 = scmp.ne.s32.totalorder %s19, %s21
      %p28 = scmp.eq.s32.totalorder %s16, 3
      %p29 = por %p27, %p28
      %p30 = scmp.ne.s32.totalorder %s21, %s22
      %p31 = scmp.eq.s32.totalorder %s16, 0
      %p32 = por %p30, %p31
      %p33 = scmp.ne.s32.totalorder %s21, %s22
      %p34 = scmp.eq.s32.totalorder %s17, 3
      %p35 = por %p33, %p34
      %p37 = scmp.ne.s32.totalorder %s22, %s36
      %p38 = scmp.eq.s32.totalorder %s17, 0
      %p39 = por %p37, %p38
      %s40 = ssub.s32 %s11, %s18
      %p41 = scmp.eq.s32.totalorder %s40, 0
      %s43 = sadd.s32 %s42, 1
      %s44 = scalar_select %p41, %s42, %s43
      %p47 = pneg %p41
      %p48 = scmp.eq.s32.totalorder %s11, 3
      %p49 = por %p47, %p48
      %p50 = scmp.ne.s32.totalorder %s42, %s45
      %p51 = scmp.eq.s32.totalorder %s11, 0
      %p52 = por %p50, %p51
      %p53 = scmp.ne.s32.totalorder %s42, %s45
      %p54 = scmp.eq.s32.totalorder %s16, 3
      %p55 = por %p53, %p54
      %p56 = scmp.ne.s32.totalorder %s45, %s46
      %p57 = scmp.eq.s32.totalorder %s16, 0
      %p58 = por %p56, %p57
      %p59 = scmp.ne.s32.totalorder %s45, %s46
      %p60 = scmp.eq.s32.totalorder %s17, 3
      %p61 = por %p59, %p60
      %p63 = scmp.ne.s32.totalorder %s46, %s62
      %p64 = scmp.eq.s32.totalorder %s17, 0
      %p65 = por %p63, %p64
      %p66 = scmp.le.s32.totalorder 1, %s11
      %p67 = scmp.lt.s32.totalorder %s11, 5
      %p68 = pnand %p66, %p67
      %p69 = pneg %p68
      // Predicated region
      $region9: #{tpu_custom_call.1} parent=5 // pred_check
        _
      $region10: #{tpu_custom_call.1} parent=5 // pred_check_branch
        %71 = sbr.rel (%p68) target = $region12
      $region11: #{tpu_custom_call.1} parent=5 // pred_region
        %s72 = ssub.s32 %s11, 1
        // Predicated region
        $region13: #{tpu_custom_call.1} parent=11 // pred_check
          %p73 = pneg %p32
        $region14: #{tpu_custom_call.1} parent=11 // pred_check_branch
          %75 = sbr.rel (%p73) target = $region16
        $region15: #{tpu_custom_call.1} parent=11 // pred_region
          %77 = vsyncadd [#allocation3], 0
          %s78 = sshll.u32 %s0, 4
          %s79 = int_to_ptr.hbm [resolvable:$true] %s78
          %s80 = sshll.u32 [#allocation2], 4
          %s81 = int_to_ptr.vmem [resolvable:$true] %s80
          %86 = dma.hbm_to_vmem [thread:$0]  %s79, 512, %s81, [#allocation3], 128, 128, 8
        $region16: #{tpu_custom_call.1} parent=11 // pred_fallthru
          _
      $region12: #{tpu_custom_call.1} parent=5 // pred_fallthru
        _
      %p87 = scmp.lt.s32.totalorder %s11, 4
      // Predicated region
      $region17: #{tpu_custom_call.1} parent=5 // pred_check
        %p88 = pneg %p87
      $region18: #{tpu_custom_call.1} parent=5 // pred_check_branch
        %90 = sbr.rel (%p88) target = $region20
      $region19: #{tpu_custom_call.1} parent=5 // pred_region
        _
      $region20: #{tpu_custom_call.1} parent=5 // pred_fallthru
        _
      %p91 = scmp.le.s32.totalorder 1, %s11
      %p92 = scmp.lt.s32.totalorder %s11, 5
      %p93 = pnand %p91, %p92
      %p94 = pneg %p93
      // Predicated region
      $region21: #{tpu_custom_call.1} parent=5 // pred_check
        _
      $region22: #{tpu_custom_call.1} parent=5 // pred_check_branch
        %96 = sbr.rel (%p93) target = $region24
      $region23: #{tpu_custom_call.1} parent=5 // pred_region
        %s97 = ssub.s32 %s11, 1
        // Predicated region
        $region25: #{tpu_custom_call.1} parent=23 // pred_check
          %p98 = pneg %p32
        $region26: #{tpu_custom_call.1} parent=23 // pred_check_branch
          %100 = sbr.rel (%p98) target = $region28
        $region27: #{tpu_custom_call.1} parent=23 // pred_region
          %102 = dma.done [#allocation3], 512
        $region28: #{tpu_custom_call.1} parent=23 // pred_fallthru
          _
        %p103 = pneg %p32
        %p104 = pneg %p29
        %p105 = pneg %p58
        %p106 = pneg %p55
        %s107 = sand.u32 %s45, 1
        %s108 = scalar_lea.sflag [#allocation4], %s107
        %s109 = sand.u32 %s45, 1
        %s110 = smul.addr %s109, 64
        %s111 = scalar_lea.vmem [#allocation5], %s110
        %s112 = smul.u32 4, %s16
        %s113 = smul.u32 %s16, 4
        %s114 = ssub.s32 15, %s113
        %s115 = scalar_lea.vmem [#allocation2], %s114
        %v116 = vld [vmem:[%s115] sm:$0xff]
        %v117 = vld [vmem:[%s115 + $0x8] sm:$0xff]
        %vm118 = vcmask 261120
        %119 = vst.msk [vmem:[%s111] sm:$0xff] %vm118, %v116
        %120 = vst.msk [vmem:[%s111 + $0x8] sm:$0xff] %vm118, %v117
        %s121 = ssub.s32 14, %s113
        %s122 = scalar_lea.vmem [#allocation2], %s121
        %v123 = vld [vmem:[%s122] sm:$0xff]
        %v124 = vld [vmem:[%s122 + $0x8] sm:$0xff]
        %s125 = scalar_lea.vmem %s111, 16 [#allocation5]
        %126 = vst.msk [vmem:[%s125] sm:$0xff] %vm118, %v123
        %127 = vst.msk [vmem:[%s125 + $0x8] sm:$0xff] %vm118, %v124
        %s128 = ssub.s32 13, %s113
        %s129 = scalar_lea.vmem [#allocation2], %s128
        %v130 = vld [vmem:[%s129] sm:$0xff]
        %v131 = vld [vmem:[%s129 + $0x8] sm:$0xff]
        %s132 = scalar_lea.vmem %s111, 32 [#allocation5]
        %133 = vst.msk [vmem:[%s132] sm:$0xff] %vm118, %v130
        %134 = vst.msk [vmem:[%s132 + $0x8] sm:$0xff] %vm118, %v131
        %s135 = ssub.s32 12, %s113
        %s136 = scalar_lea.vmem [#allocation2], %s135
        %v137 = vld [vmem:[%s136] sm:$0xff]
        %v138 = vld [vmem:[%s136 + $0x8] sm:$0xff]
        %s139 = scalar_lea.vmem %s111, 48 [#allocation5]
        %140 = vst.msk [vmem:[%s139] sm:$0xff] %vm118, %v137
        %141 = vst.msk [vmem:[%s139 + $0x8] sm:$0xff] %vm118, %v138
        %s142 = sand.u32 %s45, 1
        %s143 = scalar_lea.sflag [#allocation4], %s142
        %s144 = sand.u32 %s45, 1
        %s145 = smul.addr %s144, 64
        %s146 = scalar_lea.vmem [#allocation5], %s145
        // Predicated region
        $region29: #{tpu_custom_call.1} parent=23 // pred_check
          %p147 = pneg %p55
        $region30: #{tpu_custom_call.1} parent=23 // pred_check_branch
          %149 = sbr.rel (%p147) target = $region32
        $region31: #{tpu_custom_call.1} parent=23 // pred_region
          %s150 = smul.u32 4, %s16
          %152 = vsyncadd %s143, 0
          %s153 = smul.addr %s150, 2
          %s154 = smul.addr %s153, 8
          %s155 = scalar_lea.hbm %s1, %s154
          %s156 = sshll.u32 %s146, 4
          %s157 = int_to_ptr.vmem [resolvable:$true] %s156
          %s158 = sshll.u32 %s155, 4
          %s159 = int_to_ptr.hbm [resolvable:$true] %s158
          %164 = dma.vmem_to_hbm [thread:$0]  %s157, 1024, %s159, %s143, 128, 128, 8
        $region32: #{tpu_custom_call.1} parent=23 // pred_fallthru
          _
      $region24: #{tpu_custom_call.1} parent=5 // pred_fallthru
        _
      %p165 = scmp.le.s32.totalorder 2, %s11
      // Predicated region
      $region33: #{tpu_custom_call.1} parent=5 // pred_check
        %p166 = pneg %p165
      $region34: #{tpu_custom_call.1} parent=5 // pred_check_branch
        %168 = sbr.rel (%p166) target = $region36
      $region35: #{tpu_custom_call.1} parent=5 // pred_region
        %s169 = ssub.s32 %s11, 2
        // Predicated region
        $region37: #{tpu_custom_call.1} parent=35 // pred_check
          %p170 = pneg %p61
        $region38: #{tpu_custom_call.1} parent=35 // pred_check_branch
          %172 = sbr.rel (%p170) target = $region40
        $region39: #{tpu_custom_call.1} parent=35 // pred_region
          %s173 = sand.u32 %s46, 1
          %s174 = scalar_lea.sflag [#allocation4], %s173
          %s175 = sand.u32 %s46, 1
          %s176 = smul.addr %s175, 64
          %s177 = scalar_lea.vmem [#allocation5], %s176
          %179 = dma.done %s174, 1024
        $region40: #{tpu_custom_call.1} parent=35 // pred_fallthru
          _
      $region36: #{tpu_custom_call.1} parent=5 // pred_fallthru
        _
    $region6: #{tpu_custom_call.1} parent=1 // loop_footer
      %s15 = sadd.s32 1, %s11
    $region7: #{tpu_custom_call.1} parent=1 // loop_footer_branch
      %10 = sbr.rel target = $region3
    $region8: #{tpu_custom_call.1} parent=1 // loop_exit
      _
    %180 = vsyncpa [#allocation3], 1
    %s181 = scalar_lea.sflag [#allocation3], 1
    %182 = vsyncpa %s181, 1
    %183 = vsyncpa [#allocation4], 1
    %s184 = scalar_lea.sflag [#allocation4], 1
    %185 = vsyncpa %s184, 1

</llo_original>
